<compile_context>
chip_gen: v5e
topology: v5e:2x2
jax: 0.10.0
libtpu: 0.0.40
codegen_flags: <defaults>
</compile_context>

<pallas_src>
import functools

import jax
import jax.numpy as jnp
from jax.experimental import pallas as pl
from jax.experimental.pallas import tpu as pltpu

EPS = 1e-3                       # matches Bn2dWrapper(eps=0.001)
_HEADROOM_BYTES = 8 << 20        # VMEM headroom left for the compiler
_MAX_FUSED_BLOCK = 16 << 20      # soft cap on a single fused x block
_MAX_TILE_BLOCK = 8 << 20        # soft cap on a single two-pass x tile


# --------------------------------------------------------------------------
# Hardware-aware budgets.
# --------------------------------------------------------------------------
def _vmem_budget_bytes():
    """~75% of physical VMEM (96 MiB v5e/v6e, 48 MiB v7x); safe fallback."""
    try:
        cap = int(pltpu.get_tpu_info().vmem_capacity_bytes)
    except Exception:
        cap = 64 << 20           # v7x-sized fallback: conservative everywhere
    return max(32 << 20, (cap * 3) // 4)


def _min_sublane(itemsize):
    """Dtype-aware minimum channel tile (sublane packing)."""
    return {4: 8, 2: 16, 1: 32}.get(itemsize, 8)


def _channel_tiles(C, itemsize):
    """Valid channel tiles, largest first (2nd-to-last block dim: %8, packed,
    or full array dim)."""
    m = _min_sublane(itemsize)
    if C % m != 0:
        return [C]               # full-dim block is always legal
    tiles = [t for t in (m * 32, m * 16, m * 8, m * 4, m * 2, m)
             if t <= C and C % t == 0]
    return tiles or [C]


def _pick_fused_tc(C, N, HW, itemsize, avail_bytes):
    """Largest channel tile whose fused working set fits VMEM, preferring a
    channel grid of >= 4 (then >= 2) steps for megacore sharding/pipelining."""
    tiles = _channel_tiles(C, itemsize)

    def fits(t):
        block = N * t * HW * itemsize
        # in + out double-buffered + ~3 tile-sized f32 temps (2 accumulators
        # + transient); per-batch-row processing keeps temps at (tc, HW) f32.
        est = 4 * block + 3 * t * HW * 4
        return est <= avail_bytes and block <= _MAX_FUSED_BLOCK

    fitting = [t for t in tiles if fits(t)]
    if not fitting:
        return None
    for min_grid in (4, 2, 1):
        for t in fitting:        # largest first
            if C // t >= min_grid:
                return t
    return None


def _pick_hw_tile(HW, tc, itemsize, max_bytes):
    """Largest multiple of 128 dividing HW under a byte cap (or full HW)."""
    if HW % 128 != 0:
        return HW                # equals full dim -> allowed
    cap_elems = max(128, max_bytes // (tc * itemsize))
    best, t = 128, 128
    while t <= min(HW, cap_elems):
        if HW % t == 0:
            best = t
        t += 128
    return best


def _pick_two_pass_tiles(C, HW, itemsize, avail_bytes):
    """Channel / spatial tiles for the two-pass path; don't default to the
    smallest channel tile — keep tiles near the HBM-roofline knee."""
    tiles = _channel_tiles(C, itemsize)
    # Pass-2 working set per x tile: in + out double-buffered + ~2 f32 temps.
    per_elem = 4 * itemsize + 8
    cap_bytes = min(_MAX_TILE_BLOCK, (avail_bytes // per_elem) * itemsize)
    min_thw = 128 if HW % 128 == 0 else HW
    tc = tiles[-1]
    for t in tiles:              # largest first
        if t * min_thw * itemsize <= cap_bytes:
            tc = t
            break
    thw = _pick_hw_tile(HW, tc, itemsize, cap_bytes)
    return tc, thw


# --------------------------------------------------------------------------
# Fused single-pass kernel: whole per-channel reduction inside one block.
# --------------------------------------------------------------------------
def _bn_fused_kernel(x_ref, gamma_ref, beta_ref, o_ref, *, eps):
    # x_ref: (N, tc, HW); gamma/beta: (tc, 1).
    n = x_ref.shape[0]
    hw = x_ref.shape[2]
    inv_count = 1.0 / float(n * hw)

    # Single pass over x: per-batch-row accumulation of sum and sum(x^2),
    # keeping live f32 temps at (tc, HW) instead of (N, tc, HW).
    x0 = x_ref[0].astype(jnp.float32)                      # (tc, HW)
    acc_s = x0
    acc_q = x0 * x0
    for i in range(1, n):
        xi = x_ref[i].astype(jnp.float32)
        acc_s = acc_s + xi
        acc_q = acc_q + xi * xi

    mean = jnp.sum(acc_s, axis=1, keepdims=True) * inv_count      # (tc, 1)
    ex2 = jnp.sum(acc_q, axis=1, keepdims=True) * inv_count       # (tc, 1)
    var = jnp.maximum(ex2 - mean * mean, 0.0)                     # guard

    # Fold affine into a single per-channel FMA: y = x*a + b.
    a = gamma_ref[...] * jax.lax.rsqrt(var + eps)                 # (tc, 1)
    b = beta_ref[...] - mean * a
    for i in range(n):
        o_ref[i] = (x_ref[i].astype(jnp.float32) * a + b).astype(o_ref.dtype)


# --------------------------------------------------------------------------
# Two-pass path. Pass 1 = per-channel sum / sum of squares accumulation.
# --------------------------------------------------------------------------
def _stats_kernel(x_ref, sum_ref, sumsq_ref):
    # x_ref: (1, tc, thw); outputs: (tc, 1) f32, resident across (n, hw) axes.
    @pl.when((pl.program_id(1) == 0) & (pl.program_id(2) == 0))
    def _():
        sum_ref[...] = jnp.zeros_like(sum_ref)
        sumsq_ref[...] = jnp.zeros_like(sumsq_ref)

    x = x_ref[0].astype(jnp.float32)                       # (tc, thw)
    sum_ref[...] += jnp.sum(x, axis=1, keepdims=True)
    sumsq_ref[...] += jnp.sum(x * x, axis=1, keepdims=True)


# Pass 2 = normalize; mean/var/scale/shift recomputed per step from (tc,1)
# blocks (O(tc) work, free against DMA) — no host-side JAX between passes.
def _norm_kernel(x_ref, s_ref, ssq_ref, gamma_ref, beta_ref, o_ref,
                 *, eps, inv_count):
    mean = s_ref[...] * inv_count                          # (tc, 1)
    var = jnp.maximum(ssq_ref[...] * inv_count - mean * mean, 0.0)
    a = gamma_ref[...] * jax.lax.rsqrt(var + eps)
    b = beta_ref[...] - mean * a
    o_ref[0] = (x_ref[0].astype(jnp.float32) * a + b).astype(o_ref.dtype)


# --------------------------------------------------------------------------
# Wrapper (forward pass of Bn2dWrapper).
# --------------------------------------------------------------------------
def bn2d_wrapper_forward(x_nchw, gamma, beta, eps=EPS, force_two_pass=False):
    """x_nchw: (N, C, H, W). gamma, beta: (C,). Returns (N, C, H, W)."""
    N, C, H, W = x_nchw.shape
    HW = H * W
    x3 = x_nchw.reshape(N, C, HW)                # free reshape of NCHW
    g = gamma.reshape(C, 1).astype(jnp.float32)
    b = beta.reshape(C, 1).astype(jnp.float32)
    itemsize = jnp.dtype(x_nchw.dtype).itemsize

    vmem_limit = _vmem_budget_bytes()
    avail = max(8 << 20, vmem_limit - _HEADROOM_BYTES)

    # ---- fused single-pass path (1 read + 1 write of x) ----
    fused_tc = None if force_two_pass else _pick_fused_tc(C, N, HW, itemsize,
                                                          avail)
    if fused_tc is not None:
        tc = fused_tc
        y3 = pl.pallas_call(
            functools.partial(_bn_fused_kernel, eps=eps),
            out_shape=jax.ShapeDtypeStruct((N, C, HW), x_nchw.dtype),
            grid_spec=pltpu.PrefetchScalarGridSpec(
                num_scalar_prefetch=0,
                grid=(C // tc,),
                in_specs=[
                    pl.BlockSpec((N, tc, HW), lambda c: (0, c, 0)),
                    pl.BlockSpec((tc, 1), lambda c: (c, 0)),
                    pl.BlockSpec((tc, 1), lambda c: (c, 0)),
                ],
                out_specs=pl.BlockSpec((N, tc, HW), lambda c: (0, c, 0)),
            ),
            compiler_params=pltpu.CompilerParams(
                dimension_semantics=("parallel",),
                vmem_limit_bytes=vmem_limit,
            ),
        )(x3, g, b)
        return y3.reshape(N, C, H, W)

    # ---- size-robust two-pass path (2 reads + 1 write of x) ----
    tc, thw = _pick_two_pass_tiles(C, HW, itemsize, avail)
    grid = (C // tc, N, HW // thw)               # reduction axes last

    s, ssq = pl.pallas_call(
        _stats_kernel,
        out_shape=(jax.ShapeDtypeStruct((C, 1), jnp.float32),
                   jax.ShapeDtypeStruct((C, 1), jnp.float32)),
        grid_spec=pltpu.PrefetchScalarGridSpec(
            num_scalar_prefetch=0,
            grid=grid,
            in_specs=[pl.BlockSpec((1, tc, thw), lambda c, n, h: (n, c, h))],
            out_specs=(pl.BlockSpec((tc, 1), lambda c, n, h: (c, 0)),
                       pl.BlockSpec((tc, 1), lambda c, n, h: (c, 0))),
        ),
        compiler_params=pltpu.CompilerParams(
            dimension_semantics=("parallel", "arbitrary", "arbitrary"),
            vmem_limit_bytes=vmem_limit,
        ),
    )(x3)

    y3 = pl.pallas_call(
        functools.partial(_norm_kernel, eps=eps,
                          inv_count=1.0 / float(N * HW)),
        out_shape=jax.ShapeDtypeStruct((N, C, HW), x_nchw.dtype),
        grid_spec=pltpu.PrefetchScalarGridSpec(
            num_scalar_prefetch=0,
            grid=grid,
            in_specs=[
                pl.BlockSpec((1, tc, thw), lambda c, n, h: (n, c, h)),
                pl.BlockSpec((tc, 1), lambda c, n, h: (c, 0)),
                pl.BlockSpec((tc, 1), lambda c, n, h: (c, 0)),
                pl.BlockSpec((tc, 1), lambda c, n, h: (c, 0)),
                pl.BlockSpec((tc, 1), lambda c, n, h: (c, 0)),
            ],
            out_specs=pl.BlockSpec((1, tc, thw), lambda c, n, h: (n, c, h)),
        ),
        compiler_params=pltpu.CompilerParams(
            dimension_semantics=("parallel", "parallel", "parallel"),
            vmem_limit_bytes=vmem_limit,
        ),
    )(x3, s, ssq, g, b)
    return y3.reshape(N, C, H, W)


# --------------------------------------------------------------------------
# Self-test.
# --------------------------------------------------------------------------
if __name__ == "__main__":
    key = jax.random.PRNGKey(0)

    def ref_bn(x, gamma, beta):
        C = x.shape[1]
        xf = x.astype(jnp.float32)
        mean = jnp.mean(xf, axis=(0, 2, 3), keepdims=True)
        var = jnp.mean((xf - mean) ** 2, axis=(0, 2, 3), keepdims=True)
        y = ((xf - mean) * jax.lax.rsqrt(var + EPS)
             * gamma.reshape(1, C, 1, 1).astype(jnp.float32)
             + beta.reshape(1, C, 1, 1).astype(jnp.float32))
        return y.astype(x.dtype)

    ok = True

    # Case 1: module-sized f32 input, default + non-trivial affine, both paths.
    N, C, H, W = 2, 4, 16, 16
    kx, kg, kb, kx2 = jax.random.split(key, 4)
    x = jax.random.normal(kx, (N, C, H, W), dtype=jnp.float32)
    gamma1 = jnp.ones((C,), jnp.float32)
    beta1 = jnp.zeros((C,), jnp.float32)
    gamma2 = 1.0 + 0.1 * jax.random.normal(kg, (C,), dtype=jnp.float32)
    beta2 = 0.1 * jax.random.normal(kb, (C,), dtype=jnp.float32)
    for gamma, beta in ((gamma1, beta1), (gamma2, beta2)):
        ref = ref_bn(x, gamma, beta)
        y_fused = jax.block_until_ready(bn2d_wrapper_forward(x, gamma, beta))
        y_tiled = jax.block_until_ready(
            bn2d_wrapper_forward(x, gamma, beta, force_two_pass=True))
        ok &= bool(jnp.allclose(y_fused, ref, atol=1e-4, rtol=1e-4))
        ok &= bool(jnp.allclose(y_tiled, ref, atol=1e-4, rtol=1e-4))

    # Case 2: C=16 f32 -> exercises channel-tiled fused grid (tc=8, grid=2).
    x2 = jax.random.normal(kx2, (2, 16, 8, 8), dtype=jnp.float32)
    g16 = 1.0 + 0.05 * jax.random.normal(kg, (16,), dtype=jnp.float32)
    b16 = 0.05 * jax.random.normal(kb, (16,), dtype=jnp.float32)
    ref2 = ref_bn(x2, g16, b16)
    y2 = jax.block_until_ready(bn2d_wrapper_forward(x2, g16, b16))
    ok &= bool(jnp.allclose(y2, ref2, atol=1e-4, rtol=1e-4))

    # Case 3: bf16 input -> exercises dtype-aware (16-row) channel tiling.
    xb = x2.astype(jnp.bfloat16)
    refb = ref_bn(xb, g16, b16)
    yb = jax.block_until_ready(bn2d_wrapper_forward(xb, g16, b16))
    ok &= bool(jnp.allclose(yb.astype(jnp.float32), refb.astype(jnp.float32),
                            atol=5e-2, rtol=5e-2))

    assert ok, "mismatch vs reference"
    print("KERNEL_OK")
</pallas_src>

<mosaic_0001>
module attributes {stable_mosaic.version = 11 : i64} {
  func.func @_bn_fused_kernel(%arg0: i32, %arg1: memref<2x4x256xf32, #tpu.memory_space<vmem>>, %arg2: memref<4x1xf32, #tpu.memory_space<vmem>>, %arg3: memref<4x1xf32, #tpu.memory_space<vmem>>, %arg4: memref<2x4x256xf32, #tpu.memory_space<vmem>>) attributes {dimension_semantics = [#tpu.dimension_semantics<parallel>], iteration_bounds = array<i64: 1>, scalar_prefetch = 0 : i64, scratch_operands = 0 : i64, tpu.core_type = #tpu.core_type<tc>, window_params = [{transform_indices = @transform_0, window_bounds = array<i64: 2, 4, 256>}, {transform_indices = @transform_1, window_bounds = array<i64: 4, 1>}, {transform_indices = @transform_2, window_bounds = array<i64: 4, 1>}, {transform_indices = @transform_3, window_bounds = array<i64: 2, 4, 256>}]} {
    %c0 = arith.constant 0 : index
    %c0_0 = arith.constant 0 : index
    %c0_1 = arith.constant 0 : index
    %0 = vector.load %arg1[%c0, %c0_0, %c0_1] : memref<2x4x256xf32, #tpu.memory_space<vmem>>, vector<1x4x256xf32>
    %1 = vector.shape_cast %0 : vector<1x4x256xf32> to vector<4x256xf32>
    %2 = arith.mulf %1, %1 : vector<4x256xf32>
    %c1 = arith.constant 1 : index
    %c0_2 = arith.constant 0 : index
    %c0_3 = arith.constant 0 : index
    %3 = vector.load %arg1[%c1, %c0_2, %c0_3] : memref<2x4x256xf32, #tpu.memory_space<vmem>>, vector<1x4x256xf32>
    %4 = vector.shape_cast %3 : vector<1x4x256xf32> to vector<4x256xf32>
    %5 = arith.addf %1, %4 : vector<4x256xf32>
    %6 = arith.mulf %4, %4 : vector<4x256xf32>
    %7 = arith.addf %2, %6 : vector<4x256xf32>
    %cst = arith.constant dense<0.000000e+00> : vector<4xf32>
    %8 = vector.multi_reduction <add>, %5, %cst [1] : vector<4x256xf32> to vector<4xf32>
    %9 = vector.shape_cast %8 : vector<4xf32> to vector<4x1xf32>
    %cst_4 = arith.constant 0.001953125 : f32
    %10 = vector.broadcast %cst_4 : f32 to vector<4x1xf32>
    %11 = arith.mulf %9, %10 : vector<4x1xf32>
    %cst_5 = arith.constant dense<0.000000e+00> : vector<4xf32>
    %12 = vector.multi_reduction <add>, %7, %cst_5 [1] : vector<4x256xf32> to vector<4xf32>
    %13 = vector.shape_cast %12 : vector<4xf32> to vector<4x1xf32>
    %cst_6 = arith.constant 0.001953125 : f32
    %14 = vector.broadcast %cst_6 : f32 to vector<4x1xf32>
    %15 = arith.mulf %13, %14 : vector<4x1xf32>
    %16 = arith.mulf %11, %11 : vector<4x1xf32>
    %17 = arith.subf %15, %16 : vector<4x1xf32>
    %cst_7 = arith.constant 0.000000e+00 : f32
    %18 = vector.broadcast %cst_7 : f32 to vector<4x1xf32>
    %19 = arith.maximumf %17, %18 : vector<4x1xf32>
    %c0_8 = arith.constant 0 : index
    %c0_9 = arith.constant 0 : index
    %20 = vector.load %arg2[%c0_8, %c0_9] : memref<4x1xf32, #tpu.memory_space<vmem>>, vector<4x1xf32>
    %cst_10 = arith.constant 1.000000e-03 : f32
    %21 = vector.broadcast %cst_10 : f32 to vector<4x1xf32>
    %22 = arith.addf %19, %21 : vector<4x1xf32>
    %23 = math.rsqrt %22 : vector<4x1xf32>
    %24 = arith.mulf %20, %23 : vector<4x1xf32>
    %c0_11 = arith.constant 0 : index
    %c0_12 = arith.constant 0 : index
    %25 = vector.load %arg3[%c0_11, %c0_12] : memref<4x1xf32, #tpu.memory_space<vmem>>, vector<4x1xf32>
    %26 = arith.mulf %11, %24 : vector<4x1xf32>
    %27 = arith.subf %25, %26 : vector<4x1xf32>
    %c0_13 = arith.constant 0 : index
    %c0_14 = arith.constant 0 : index
    %c0_15 = arith.constant 0 : index
    %28 = vector.load %arg1[%c0_13, %c0_14, %c0_15] : memref<2x4x256xf32, #tpu.memory_space<vmem>>, vector<1x4x256xf32>
    %29 = vector.shape_cast %28 : vector<1x4x256xf32> to vector<4x256xf32>
    %30 = vector.broadcast %24 : vector<4x1xf32> to vector<4x256xf32>
    %31 = arith.mulf %29, %30 : vector<4x256xf32>
    %32 = vector.broadcast %27 : vector<4x1xf32> to vector<4x256xf32>
    %33 = arith.addf %31, %32 : vector<4x256xf32>
    %c0_16 = arith.constant 0 : index
    %c0_17 = arith.constant 0 : index
    %c0_18 = arith.constant 0 : index
    %34 = vector.load %arg4[%c0_16, %c0_17, %c0_18] : memref<2x4x256xf32, #tpu.memory_space<vmem>>, vector<1x4x256xf32>
    %35 = vector.shape_cast %34 : vector<1x4x256xf32> to vector<4x256xf32>
    %36 = vector.shape_cast %33 : vector<4x256xf32> to vector<1x4x256xf32>
    tpu.vector_store %arg4[%c0_16, %c0_17, %c0_18], %36 {strides = array<i32>} : memref<2x4x256xf32, #tpu.memory_space<vmem>>, vector<1x4x256xf32>,
    %c1_19 = arith.constant 1 : index
    %c0_20 = arith.constant 0 : index
    %c0_21 = arith.constant 0 : index
    %37 = vector.load %arg1[%c1_19, %c0_20, %c0_21] : memref<2x4x256xf32, #tpu.memory_space<vmem>>, vector<1x4x256xf32>
    %38 = vector.shape_cast %37 : vector<1x4x256xf32> to vector<4x256xf32>
    %39 = vector.broadcast %24 : vector<4x1xf32> to vector<4x256xf32>
    %40 = arith.mulf %38, %39 : vector<4x256xf32>
    %41 = vector.broadcast %27 : vector<4x1xf32> to vector<4x256xf32>
    %42 = arith.addf %40, %41 : vector<4x256xf32>
    %c1_22 = arith.constant 1 : index
    %c0_23 = arith.constant 0 : index
    %c0_24 = arith.constant 0 : index
    %43 = vector.load %arg4[%c1_22, %c0_23, %c0_24] : memref<2x4x256xf32, #tpu.memory_space<vmem>>, vector<1x4x256xf32>
    %44 = vector.shape_cast %43 : vector<1x4x256xf32> to vector<4x256xf32>
    %45 = vector.shape_cast %42 : vector<4x256xf32> to vector<1x4x256xf32>
    tpu.vector_store %arg4[%c1_22, %c0_23, %c0_24], %45 {strides = array<i32>} : memref<2x4x256xf32, #tpu.memory_space<vmem>>, vector<1x4x256xf32>,
    return
  }
  func.func @transform_0(%arg0: i32) -> (i32, i32, i32) {
    %c0_i32 = arith.constant 0 : i32
    %c0_i32_0 = arith.constant 0 : i32
    %c0_i32_1 = arith.constant 0 : i32
    return %c0_i32, %arg0, %c0_i32_0 : i32, i32, i32
  }
  func.func @transform_1(%arg0: i32) -> (i32, i32) {
    %c0_i32 = arith.constant 0 : i32
    %c0_i32_0 = arith.constant 0 : i32
    return %arg0, %c0_i32 : i32, i32
  }
  func.func @transform_2(%arg0: i32) -> (i32, i32) {
    %c0_i32 = arith.constant 0 : i32
    %c0_i32_0 = arith.constant 0 : i32
    return %arg0, %c0_i32 : i32, i32
  }
  func.func @transform_3(%arg0: i32) -> (i32, i32, i32) {
    %c0_i32 = arith.constant 0 : i32
    %c0_i32_0 = arith.constant 0 : i32
    %c0_i32_1 = arith.constant 0 : i32
    return %c0_i32, %arg0, %c0_i32_0 : i32, i32, i32
  }
}

</mosaic_0001>

<llo_original>
// kernel: tpu_custom_call.1
$region0: #{tpu_custom_call.1}
  #allocation0 [shape = 'u32[]', space=smem, size = 0x4, offset = 0x4, fixed_abs, tag = 'smem constant byte address 0x4 - core index']
  #allocation1 [shape = 'u32[72,128]{1,0:T(1,128)}', space=vmem, size = 0x9000, scoped, tag = 'internal scratch']
  %s0 = inlined_call_operand.hbm [shape: f32[2,4,256], index: 0, kind: input, shape index: {}]
  %s1 = inlined_call_operand.vmem [shape: f32[4,1], index: 1, kind: input, shape index: {}]
  %s2 = inlined_call_operand.vmem [shape: f32[4,1], index: 2, kind: input, shape index: {}]
  %s3 = inlined_call_operand.hbm [shape: f32[2,4,256], index: 3, kind: output, shape index: {}]
  %s4 = sld [smem:[#allocation0]]
  $region26: #{tpu_custom_call.1} parent=0
    _
  %s6 = ssub.s32 1, %s4
  %s7 = scalar_select 0, %s6, %s4
  $region1: #{tpu_custom_call.1} parent=0
    #allocation2 [shape = 'u8[8192]{0}', space=vmem, size = 0x2000, scoped, tag = 'input window, operand 0, single buffered']
    #allocation3 [shape = 's32[1]{0}', space=sflag, size = 0x4, scoped, tag = 'scoped memory for tpu_custom_call.1']
    #allocation4 [shape = 's32[1]{0}', space=sflag, size = 0x4, scoped, tag = 'scoped memory for tpu_custom_call.1']
    #allocation5 [shape = 'u8[8192]{0}', space=vmem, size = 0x2000, scoped, tag = 'output window, operand 0, single buffered']
    %8 = vsyncpa [#allocation3], 0
    %9 = vsyncpa [#allocation4], 0
    // Predicated region
    $region2: #{tpu_custom_call.1} parent=1 // pred_check
      _
    $region3: #{tpu_custom_call.1} parent=1 // pred_check_branch
      %11 = sbr.rel (0) target = $region5
    $region4: #{tpu_custom_call.1} parent=1 // pred_region
      %13 = vsyncadd [#allocation3], 0
      %s14 = sshll.u32 %s0, 4
      %s15 = int_to_ptr.hbm [resolvable:$true] %s14
      %s16 = sshll.u32 [#allocation2], 4
      %s17 = int_to_ptr.vmem [resolvable:$true] %s16
      %22 = dma.hbm_to_vmem [thread:$0]  %s15, 256, %s17, [#allocation3], 128, 128, 8
    $region5: #{tpu_custom_call.1} parent=1 // pred_fallthru
      _
    // Predicated region
    $region6: #{tpu_custom_call.1} parent=1 // pred_check
      _
    $region7: #{tpu_custom_call.1} parent=1 // pred_check_branch
      %24 = sbr.rel (0) target = $region9
    $region8: #{tpu_custom_call.1} parent=1 // pred_region
      _
    $region9: #{tpu_custom_call.1} parent=1 // pred_fallthru
      _
    // Predicated region
    $region10: #{tpu_custom_call.1} parent=1 // pred_check
      _
    $region11: #{tpu_custom_call.1} parent=1 // pred_check_branch
      %26 = sbr.rel (0) target = $region13
    $region12: #{tpu_custom_call.1} parent=1 // pred_region
      _
    $region13: #{tpu_custom_call.1} parent=1 // pred_fallthru
      _
    // Predicated region
    $region14: #{tpu_custom_call.1} parent=1 // pred_check
      _
    $region15: #{tpu_custom_call.1} parent=1 // pred_check_branch
      %28 = sbr.rel (0) target = $region17
    $region16: #{tpu_custom_call.1} parent=1 // pred_region
      %30 = dma.done [#allocation3], 256
    $region17: #{tpu_custom_call.1} parent=1 // pred_fallthru
      _
    %v31 = vld [vmem:[#allocation2] sm:$0xff]
    %v32 = vmul.f32 %v31, %v31
    %s33 = scalar_lea.vmem [#allocation2], 8
    %v34 = vld [vmem:[%s33] sm:$0xff]
    %v35 = vadd.f32 %v31, %v34
    %v36 = vmul.f32 %v34, %v34
    %v37 = vadd.f32 %v32, %v36
    %39 = vst [vmem:[#allocation1] ss:$2 sm:$0xff] %v35
    %v40 = vld.sshfl [vmem:[#allocation1] sm:$0xff pattern:$0x75316420]
    %v41 = vld.sshfl [vmem:[#allocation1 + $0x8] sm:$0xff pattern:$0x75316420]
    %vm44 = vcmask 1043456
    %v45 = vsel %vm44, %v40, 0.0
    %v46 = vsel %vm44, %v41, 0.0
    %v47 = vadd.f32 %v45, %v46
    %48 = vadd.xlane.f32.xlu0 %v47
    %v49 = vpop.xlane.xlu0 %48
    %v50 = vmul.f32 %v49, 0.001953125
    %52 = vst [vmem:[#allocation1] ss:$2 sm:$0xff] %v37
    %v53 = vld.sshfl [vmem:[#allocation1] sm:$0xff pattern:$0x75316420]
    %v54 = vld.sshfl [vmem:[#allocation1 + $0x8] sm:$0xff pattern:$0x75316420]
    %v57 = vsel %vm44, %v53, 0.0
    %v58 = vsel %vm44, %v54, 0.0
    %v59 = vadd.f32 %v57, %v58
    %60 = vadd.xlane.f32.xlu0 %v59
    %v61 = vpop.xlane.xlu0 %60
    %v62 = vmul.f32 %v61, 0.001953125
    %v63 = vmul.f32 %v50, %v50
    %v64 = vsub.f32 %v62, %v63
    %v65 = vmax.f32 %v64, 0.0
    %v66 = vld [vmem:[%s1] sm:$0xf]
    %v67 = vadd.f32 %v65, 0.001
    %v68 = vrsqrt.pop %v67
    %v69 = vmul.f32 %v68, %v67
    %v70 = vmul.f32 %v69, %v68
    %v71 = vmul.f32 0.5, %v70
    %v72 = vsub.f32 1.5, %v71
    %v73 = vmul.f32 %v68, %v72
    %vm74 = vweird.f32 %v67
    %vm75 = vweird.f32 %v68
    %vm76 = vmor %vm74, %vm75
    %v77 = vsel %vm76, %v68, %v73
    %v78 = vmul.f32 %v66, %v77
    %v79 = vld [vmem:[%s2] sm:$0xf]
    %v80 = vmul.f32 %v50, %v78
    %v81 = vsub.f32 %v79, %v80
    %83 = vset.pattern.permute.xlu0 0
    %84 = vperm.xlu0 %83, %v78
    %v85 = vpop.permute.xlu0 %84
    %v87 = vunpack.c.l.s4 839922192
    %v88 = vunpack.c.0.s8 %v87
    %v89 = vperm.slane %v85, %v88
    %v91 = vmul.f32 %v31, %v89
    %93 = vset.pattern.permute.xlu0 0
    %94 = vperm.xlu0 %93, %v81
    %v95 = vpop.permute.xlu0 %94
    %v97 = vunpack.c.l.s4 839922192
    %v98 = vunpack.c.0.s8 %v97
    %v99 = vperm.slane %v95, %v98
    %v101 = vadd.f32 %v91, %v99
    %102 = vst [vmem:[#allocation5] sm:$0xff] %v101
    %v103 = vld [vmem:[%s33] sm:$0xff]
    %v104 = vmul.f32 %v103, %v89
    %v105 = vadd.f32 %v104, %v99
    %s106 = scalar_lea.vmem [#allocation5], 8
    %107 = vst [vmem:[%s106] sm:$0xff] %v105
    // Predicated region
    $region18: #{tpu_custom_call.1} parent=1 // pred_check
      _
    $region19: #{tpu_custom_call.1} parent=1 // pred_check_branch
      %109 = sbr.rel (0) target = $region21
    $region20: #{tpu_custom_call.1} parent=1 // pred_region
      %111 = vsyncadd [#allocation4], 0
      %s112 = sshll.u32 [#allocation5], 4
      %s113 = int_to_ptr.vmem [resolvable:$true] %s112
      %s114 = sshll.u32 %s3, 4
      %s115 = int_to_ptr.hbm [resolvable:$true] %s114
      %120 = dma.vmem_to_hbm [thread:$0]  %s113, 256, %s115, [#allocation4], 128, 128, 8
    $region21: #{tpu_custom_call.1} parent=1 // pred_fallthru
      _
    // Predicated region
    $region22: #{tpu_custom_call.1} parent=1 // pred_check
      _
    $region23: #{tpu_custom_call.1} parent=1 // pred_check_branch
      %122 = sbr.rel (0) target = $region25
    $region24: #{tpu_custom_call.1} parent=1 // pred_region
      %124 = dma.done [#allocation4], 256
    $region25: #{tpu_custom_call.1} parent=1 // pred_fallthru
      _
    %125 = vsyncpa [#allocation3], 1
    %126 = vsyncpa [#allocation4], 1

</llo_original>
